<compile_context>
chip_gen: v5e
topology: v5e:2x2
jax: 0.10.0
libtpu: 0.0.40
codegen_flags: <defaults>
</compile_context>

<pallas_src>
import functools

import jax
import jax.numpy as jnp
from jax import lax
from jax.experimental import pallas as pl
from jax.experimental.pallas import tpu as pltpu


def _round_up(x: int, m: int) -> int:
    return ((x + m - 1) // m) * m


def _vmem_budget_and_cap():
    """Chip-aware VMEM sizing: (x-tile budget, vmem_limit cap) in bytes."""
    cap_bytes = 64 * 1024 * 1024  # conservative default (v7x physical VMEM)
    try:
        cap_bytes = int(getattr(pltpu.get_tpu_info(), "vmem_capacity_bytes", cap_bytes))
    except Exception:
        pass
    if cap_bytes >= 100 * 1024 * 1024:       # v5e / v6e: 128 MiB VMEM
        return 32 * 1024 * 1024, 96 * 1024 * 1024
    return 16 * 1024 * 1024, 48 * 1024 * 1024  # v7x: 64 MiB VMEM


def _logreg_kernel(x_ref, w_ref, b_ref, o_ref, acc_ref, *, f_rem, tf):
    # x_ref: (TB, TF) VMEM   w_ref: (1, TF) VMEM   b_ref: (1,) SMEM
    # o_ref: (TB, 1) VMEM    acc_ref: (TB, 1) f32 VMEM scratch
    k = pl.program_id(1)
    nk = pl.num_programs(1)

    @pl.when(k == 0)
    def _():
        acc_ref[...] = jnp.zeros_like(acc_ref)

    # N=1 matvec on VPU (elementwise multiply) + XLU (cross-lane row reduce).
    prod = x_ref[...] * w_ref[...]
    if f_rem:
        # Only taken when the feature axis is split and the last tile is
        # partial: zero out-of-range columns (their contents are garbage).
        col = lax.broadcasted_iota(jnp.int32, prod.shape, dimension=1)
        valid = jnp.where(k == nk - 1, f_rem, tf)
        prod = jnp.where(col < valid, prod, 0.0)
    acc_ref[...] += jnp.sum(prod, axis=-1, keepdims=True)

    @pl.when(k == nk - 1)
    def _():
        z = acc_ref[...] + b_ref[0]
        # Exact sigmoid: exp hits the EUP, one divide; hidden under the x DMA.
        o_ref[...] = (1.0 / (1.0 + jnp.exp(-z))).astype(o_ref.dtype)


@jax.jit
def pallas_logreg(x, w_row, b):
    """sigmoid(x @ w_row.T + b).  x: (B, F) f32, w_row: (1, F) f32, b: (1,) f32."""
    B, F = x.shape
    budget, limit_cap = _vmem_budget_and_cap()

    # Size the (TB, TF) x tile so 2 double-buffered tiles + a possible product
    # temp stay within ~3/4 of the budget.
    tile_bytes = budget // 4
    row_bytes = F * 4
    tb_full = min(_round_up(B, 8), max(8, ((tile_bytes // max(row_bytes, 1)) // 8) * 8))
    if tb_full * row_bytes <= tile_bytes:
        TB, TF = tb_full, F                      # full-F tile: single F step
    else:
        # Very wide F: lane-aligned feature chunks reduced into acc_ref.
        TB = min(_round_up(B, 8), 512)
        TF = max(128, ((tile_bytes // (TB * 4)) // 128) * 128)
        TF = min(TF, _round_up(F, 128))
    f_rem = F % TF if TF < F else 0

    # No jnp.pad: partial trailing blocks are handled by Pallas; garbage rows
    # beyond B are never written into the (B, 1) output.
    grid = (pl.cdiv(B, TB), pl.cdiv(F, TF))

    needed = 3 * TB * TF * 4 + 2 * TF * 4 + 4 * TB * 4
    vmem_limit = int(min(max(needed * 3 // 2, 32 * 1024 * 1024), limit_cap))

    kernel = functools.partial(_logreg_kernel, f_rem=f_rem, tf=TF)
    out = pl.pallas_call(
        kernel,
        out_shape=jax.ShapeDtypeStruct((B, 1), jnp.float32),
        grid=grid,
        in_specs=[
            pl.BlockSpec((TB, TF), lambda i, k: (i, k)),           # x: streamed
            pl.BlockSpec((1, TF), lambda i, k: (0, k)),            # w: tiny, follows k
            pl.BlockSpec(memory_space=pltpu.MemorySpace.SMEM),     # b: scalar in SMEM
        ],
        out_specs=pl.BlockSpec((TB, 1), lambda i, k: (i, 0)),
        scratch_shapes=[pltpu.VMEM((TB, 1), jnp.float32)],
        compiler_params=pltpu.CompilerParams(
            # Batch axis "parallel" (v7x 2-TC sharding); F axis is the
            # reduction -> innermost, "arbitrary".
            dimension_semantics=("parallel", "arbitrary"),
            vmem_limit_bytes=vmem_limit,
        ),
    )(x, w_row, b)
    return out


if __name__ == "__main__":
    batch, n_features = 8, 32

    key = jax.random.PRNGKey(0)
    kx, kw, kb = jax.random.split(key, 3)
    x = jax.random.normal(kx, (batch, n_features), dtype=jnp.float32)

    # Case 1: parameters exactly as the module's __init__ (zero weight / bias).
    w0 = jnp.zeros((1, n_features), dtype=jnp.float32)
    b0 = jnp.zeros((1,), dtype=jnp.float32)
    out0 = jax.block_until_ready(pallas_logreg(x, w0, b0))
    ref0 = jax.nn.sigmoid(x @ w0.T + b0)
    assert out0.shape == (batch, 1)
    assert jnp.allclose(out0, ref0, atol=1e-4), (out0, ref0)

    # Case 2: random nonzero parameters (exercises matvec + bias + sigmoid).
    w1 = 0.5 * jax.random.normal(kw, (1, n_features), dtype=jnp.float32)
    b1 = 0.5 * jax.random.normal(kb, (1,), dtype=jnp.float32)
    out1 = jax.block_until_ready(pallas_logreg(x, w1, b1))
    ref1 = jax.nn.sigmoid(x @ w1.T + b1)
    assert out1.shape == (batch, 1)
    assert jnp.allclose(out1, ref1, atol=1e-4), (out1, ref1)

    print("KERNEL_OK")
</pallas_src>

<mosaic_0001>
module attributes {stable_mosaic.version = 11 : i64} {
  func.func @_logreg_kernel(%arg0: i32, %arg1: i32, %arg2: memref<8x32xf32, #tpu.memory_space<vmem>>, %arg3: memref<1x32xf32, #tpu.memory_space<vmem>>, %arg4: memref<1xf32, #tpu.memory_space<smem>>, %arg5: memref<8x1xf32, #tpu.memory_space<vmem>>, %arg6: memref<8x1xf32, #tpu.memory_space<vmem>>) attributes {dimension_semantics = [#tpu.dimension_semantics<parallel>, #tpu.dimension_semantics<arbitrary>], iteration_bounds = array<i64: 1, 1>, scalar_prefetch = 0 : i64, scratch_operands = 1 : i64, tpu.core_type = #tpu.core_type<tc>, window_params = [{transform_indices = @transform_0, window_bounds = array<i64: 8, 32>}, {transform_indices = @transform_1, window_bounds = array<i64: 1, 32>}, {transform_indices = @transform_2, window_bounds = array<i64: 1>}, {transform_indices = @transform_3, window_bounds = array<i64: 8, 1>}]} {
    %c0_i32 = arith.constant 0 : i32
    %0 = arith.cmpi eq, %arg1, %c0_i32 : i32
    %1 = arith.extui %0 : i1 to i32
    %c0_i32_0 = arith.constant 0 : i32
    %2 = arith.cmpi ne, %1, %c0_i32_0 : i32
    scf.if %2 {
      %cst_10 = arith.constant 0.000000e+00 : f32
      %15 = vector.broadcast %cst_10 : f32 to vector<8x1xf32>
      %c0_11 = arith.constant 0 : index
      %c0_12 = arith.constant 0 : index
      %16 = vector.load %arg6[%c0_11, %c0_12] : memref<8x1xf32, #tpu.memory_space<vmem>>, vector<8x1xf32>
      tpu.vector_store %arg6[%c0_11, %c0_12], %15 {strides = array<i32>} : memref<8x1xf32, #tpu.memory_space<vmem>>, vector<8x1xf32>,
    } else {
    }
    %c0 = arith.constant 0 : index
    %c0_1 = arith.constant 0 : index
    %3 = vector.load %arg2[%c0, %c0_1] : memref<8x32xf32, #tpu.memory_space<vmem>>, vector<8x32xf32>
    %c0_2 = arith.constant 0 : index
    %c0_3 = arith.constant 0 : index
    %4 = vector.load %arg3[%c0_2, %c0_3] : memref<1x32xf32, #tpu.memory_space<vmem>>, vector<1x32xf32>
    %5 = vector.broadcast %4 : vector<1x32xf32> to vector<8x32xf32>
    %6 = arith.mulf %3, %5 : vector<8x32xf32>
    %c0_4 = arith.constant 0 : index
    %c0_5 = arith.constant 0 : index
    %7 = vector.load %arg6[%c0_4, %c0_5] : memref<8x1xf32, #tpu.memory_space<vmem>>, vector<8x1xf32>
    %cst = arith.constant dense<0.000000e+00> : vector<8xf32>
    %8 = vector.multi_reduction <add>, %6, %cst [1] : vector<8x32xf32> to vector<8xf32>
    %9 = vector.shape_cast %8 : vector<8xf32> to vector<8x1xf32>
    %10 = arith.addf %7, %9 : vector<8x1xf32>
    %c0_6 = arith.constant 0 : index
    %c0_7 = arith.constant 0 : index
    %11 = vector.load %arg6[%c0_6, %c0_7] : memref<8x1xf32, #tpu.memory_space<vmem>>, vector<8x1xf32>
    tpu.vector_store %arg6[%c0_6, %c0_7], %10 {strides = array<i32>} : memref<8x1xf32, #tpu.memory_space<vmem>>, vector<8x1xf32>,
    %c0_i32_8 = arith.constant 0 : i32
    %12 = arith.cmpi eq, %arg1, %c0_i32_8 : i32
    %13 = arith.extui %12 : i1 to i32
    %c0_i32_9 = arith.constant 0 : i32
    %14 = arith.cmpi ne, %13, %c0_i32_9 : i32
    scf.if %14 {
      %c0_10 = arith.constant 0 : index
      %c0_11 = arith.constant 0 : index
      %15 = vector.load %arg6[%c0_10, %c0_11] : memref<8x1xf32, #tpu.memory_space<vmem>>, vector<8x1xf32>
      %c0_12 = arith.constant 0 : index
      %16 = memref.load %arg4[%c0_12] : memref<1xf32, #tpu.memory_space<smem>>
      %17 = vector.broadcast %16 : f32 to vector<8x1xf32>
      %18 = arith.addf %15, %17 : vector<8x1xf32>
      %cst_13 = arith.constant 0.000000e+00 : f32
      %19 = vector.broadcast %cst_13 : f32 to vector<8x1xf32>
      %20 = arith.subf %19, %18 : vector<8x1xf32>
      %21 = math.exp %20 : vector<8x1xf32>
      %cst_14 = arith.constant 1.000000e+00 : f32
      %22 = vector.broadcast %cst_14 : f32 to vector<8x1xf32>
      %23 = arith.addf %22, %21 : vector<8x1xf32>
      %cst_15 = arith.constant 1.000000e+00 : f32
      %24 = vector.broadcast %cst_15 : f32 to vector<8x1xf32>
      %25 = arith.divf %24, %23 : vector<8x1xf32>
      %c0_16 = arith.constant 0 : index
      %c0_17 = arith.constant 0 : index
      %26 = vector.load %arg5[%c0_16, %c0_17] : memref<8x1xf32, #tpu.memory_space<vmem>>, vector<8x1xf32>
      tpu.vector_store %arg5[%c0_16, %c0_17], %25 {strides = array<i32>} : memref<8x1xf32, #tpu.memory_space<vmem>>, vector<8x1xf32>,
    } else {
    }
    return
  }
  func.func @transform_0(%arg0: i32, %arg1: i32) -> (i32, i32) {
    %c0_i32 = arith.constant 0 : i32
    return %arg0, %arg1 : i32, i32
  }
  func.func @transform_1(%arg0: i32, %arg1: i32) -> (i32, i32) {
    %c0_i32 = arith.constant 0 : i32
    %c0_i32_0 = arith.constant 0 : i32
    return %c0_i32, %arg1 : i32, i32
  }
  func.func @transform_2(%arg0: i32, %arg1: i32) -> i32 {
    %c0_i32 = arith.constant 0 : i32
    %c0_i32_0 = arith.constant 0 : i32
    return %c0_i32 : i32
  }
  func.func @transform_3(%arg0: i32, %arg1: i32) -> (i32, i32) {
    %c0_i32 = arith.constant 0 : i32
    %c0_i32_0 = arith.constant 0 : i32
    return %arg0, %c0_i32 : i32, i32
  }
}

</mosaic_0001>

<llo_original>
// kernel: pallas_logreg.1
$region0: #{pallas_logreg.1}
  #allocation0 [shape = 'u32[]', space=smem, size = 0x4, offset = 0x4, fixed_abs, tag = 'smem constant byte address 0x4 - core index']
  #allocation1 [shape = 'u32[72,128]{1,0:T(1,128)}', space=vmem, size = 0x9000, scoped, tag = 'internal scratch']
  #allocation2 [shape = 'f32[8,1]{1,0:T(8,128)}', space=vmem, size = 0x1000, scoped, tag = 'scratch operand']
  #allocation3 [shape = 'f32[1]{0:T(128)S(6)}', space=smem, size = 0x200, scoped, tag = 'scoped memory for pallas_logreg.1']
  %s0 = inlined_call_operand.hbm [shape: f32[8,32], index: 0, kind: input, shape index: {}]
  %s1 = inlined_call_operand.vmem [shape: f32[1,32], index: 1, kind: input, shape index: {}]
  %s2 = inlined_call_operand.<no memory space> [shape: f32[1], index: 2, kind: input, shape index: {}]
  %s3 = inlined_call_operand.vmem [shape: f32[8,1], index: 3, kind: output, shape index: {}]
  %s4 = sld [smem:[#allocation0]]
  $region34: #{pallas_logreg.1} parent=0
    _
  %s6 = ssub.s32 1, %s4
  %s7 = scalar_select 0, %s6, %s4
  %8 = sst [smem:[#allocation3]] %s2
  $region1: #{pallas_logreg.1} parent=0
    #allocation4 [shape = 'u8[4096]{0}', space=vmem, size = 0x1000, scoped, tag = 'input window, operand 0, single buffered']
    #allocation5 [shape = 's32[1]{0}', space=sflag, size = 0x4, scoped, tag = 'scoped memory for pallas_logreg.1']
    %9 = vsyncpa [#allocation5], 0
    // Predicated region
    $region2: #{pallas_logreg.1} parent=1 // pred_check
      _
    $region3: #{pallas_logreg.1} parent=1 // pred_check_branch
      %11 = sbr.rel (0) target = $region5
    $region4: #{pallas_logreg.1} parent=1 // pred_region
      %13 = vsyncadd [#allocation5], 0
      %s15 = sshll.u32 %s0, 4
      %s16 = int_to_ptr.hbm [resolvable:$true] %s15
      %s17 = sshll.u32 [#allocation4], 4
      %s18 = int_to_ptr.vmem [resolvable:$true] %s17
      %20 = dma.hbm_to_vmem [thread:$0]  %s16, 128, %s18, [#allocation5]
    $region5: #{pallas_logreg.1} parent=1 // pred_fallthru
      _
    // Predicated region
    $region6: #{pallas_logreg.1} parent=1 // pred_check
      _
    $region7: #{pallas_logreg.1} parent=1 // pred_check_branch
      %22 = sbr.rel (0) target = $region9
    $region8: #{pallas_logreg.1} parent=1 // pred_region
      _
    $region9: #{pallas_logreg.1} parent=1 // pred_fallthru
      _
    // Predicated region
    $region10: #{pallas_logreg.1} parent=1 // pred_check
      _
    $region11: #{pallas_logreg.1} parent=1 // pred_check_branch
      %24 = sbr.rel (0) target = $region13
    $region12: #{pallas_logreg.1} parent=1 // pred_region
      _
    $region13: #{pallas_logreg.1} parent=1 // pred_fallthru
      _
    // Predicated region
    $region14: #{pallas_logreg.1} parent=1 // pred_check
      _
    $region15: #{pallas_logreg.1} parent=1 // pred_check_branch
      %26 = sbr.rel (0) target = $region17
    $region16: #{pallas_logreg.1} parent=1 // pred_region
      %28 = dma.done [#allocation5], 128
    $region17: #{pallas_logreg.1} parent=1 // pred_fallthru
      _
    %p29 = scmp.eq.s32.totalorder 0, 0
    // Predicated region
    $region18: #{pallas_logreg.1} parent=1 // pred_check
      %p30 = pneg %p29
    $region19: #{pallas_logreg.1} parent=1 // pred_check_branch
      %32 = sbr.rel (%p30) target = $region21
    $region20: #{pallas_logreg.1} parent=1 // pred_region
      %vm33 = vcmask 7168
      %34 = vst.msk [vmem:[#allocation2] sm:$0xff] %vm33, 0.0
    $region21: #{pallas_logreg.1} parent=1 // pred_fallthru
      _
    %v35 = vld [vmem:[#allocation4] sm:$0xff]
    %v36 = vld [vmem:[%s1] sm:$0x1]
    %v38 = vperm.slane %v36, 0
    %v40 = vmul.f32 %v35, %v38
    %v41 = vld [vmem:[#allocation2] sm:$0xff]
    %vm42 = vcmask 261120
    %v43 = vsel %vm42, %v40, 0.0
    %44 = vadd.xlane.f32.xlu0 %v43
    %v45 = vpop.xlane.xlu0 %44
    %v46 = vadd.f32 %v41, %v45
    %vm47 = vcmask 7168
    %48 = vst.msk [vmem:[#allocation2] sm:$0xff] %vm47, %v46
    // Predicated region
    $region22: #{pallas_logreg.1} parent=1 // pred_check
      %p49 = pneg %p29
    $region23: #{pallas_logreg.1} parent=1 // pred_check_branch
      %51 = sbr.rel (%p49) target = $region25
    $region24: #{pallas_logreg.1} parent=1 // pred_region
      %v52 = vld [vmem:[#allocation2] sm:$0xff]
      %s53 = sld [smem:[#allocation3]]
      %v54 = vstv %s53
      %v55 = vadd.f32 %v52, %v54
      %v56 = vsub.f32 0.0, %v55
      %v57 = vmul.f32 %v56, 1.442695
      %v58 = vpow.pop %v57
      %v59 = vadd.f32 %v58, 1.0
      %v60 = vrcp.pop %v59
      %v61 = vmul.f32 %v59, %v60
      %v62 = vsub.f32 1.0, %v61
      %v63 = vmul.f32 %v60, %v62
      %v64 = vadd.f32 %v60, %v63
      %vm65 = vweird.f32 %v59
      %vm66 = vweird.f32 %v60
      %vm67 = vmor %vm65, %vm66
      %v68 = vsel %vm67, %v60, %v64
      %v69 = vand.u32 2147483647, %v59
      %vm70 = vcmp.eq.f32.partialorder %v69, 8.507059e+37
      %v71 = vand.u32 %v59, 2147483648
      %v72 = vor.u32 1.1754944e-38, %v71
      %v73 = vsel %vm70, %v72, %v68
      %v74 = vmul.f32 1.0, %v73
      %75 = vst.msk [vmem:[%s3] sm:$0xff] %vm47, %v74
    $region25: #{pallas_logreg.1} parent=1 // pred_fallthru
      _
    // Predicated region
    $region26: #{pallas_logreg.1} parent=1 // pred_check
      _
    $region27: #{pallas_logreg.1} parent=1 // pred_check_branch
      %77 = sbr.rel (0) target = $region29
    $region28: #{pallas_logreg.1} parent=1 // pred_region
      _
    $region29: #{pallas_logreg.1} parent=1 // pred_fallthru
      _
    // Predicated region
    $region30: #{pallas_logreg.1} parent=1 // pred_check
      _
    $region31: #{pallas_logreg.1} parent=1 // pred_check_branch
      %79 = sbr.rel (0) target = $region33
    $region32: #{pallas_logreg.1} parent=1 // pred_region
      _
    $region33: #{pallas_logreg.1} parent=1 // pred_fallthru
      _
    %80 = vsyncpa [#allocation5], 1

</llo_original>
